<compile_context>
chip_gen: v5e
topology: v5e:2x2
jax: 0.10.0
libtpu: 0.0.40
codegen_flags: <defaults>
</compile_context>

<pallas_src>
import functools

import jax
import jax.numpy as jnp
from jax.experimental import pallas as pl
from jax.experimental.pallas import tpu as pltpu

HIDDEN_DIMS = [32, 8, 4, 2]
OUT_DIM = 2

# Activation layout inside the packed 128-wide output slab:
#   z1[0:32] h1[32:64] z2[64:72] h2[72:80] z3[80:84] h3[84:88]
#   z4[88:90] h4[90:92] z5[92:94]   (94:128 zero padding)
ACT_WIDTHS = (32, 32, 8, 8, 4, 4, 2, 2, 2)
OUT_SLAB = 128
SP_ROWS = 40  # packed small-parameter slab rows (multiple of 8)


def _round_up(x, m):
    return (x + m - 1) // m * m


def _vpu_linear(h, w, b, k):
    """Tiny linear layer on the VPU: sum_k h[:, k] * w[k, :] + b (no MXU)."""
    z = h[:, 0:1] * w[0:1, :] + b
    for i in range(1, k):
        z = z + h[:, i:i + 1] * w[i:i + 1, :]
    return z


def _mlp_kernel(x_ref, w1_ref, sp_ref, out_ref):
    """Fused MLP forward for one batch tile.

    x_ref:   (tile_b, in_pad)  zero-padded input
    w1_ref:  (in_pad, 32)      zero-padded first-layer weight
    sp_ref:  (40, 128)         packed W2..W5 + b1..b5
    out_ref: (tile_b, 128)     packed activation slab (see ACT layout above)
    """
    x = x_ref[...]
    sp = sp_ref[...]

    # Unpack small parameters (static register slices, all tiny).
    w2 = sp[0:32, 0:8]
    w3 = sp[0:8, 8:12]
    w4 = sp[0:4, 12:14]
    w5 = sp[0:2, 14:16]
    b1 = sp[32:33, 0:32]
    b2 = sp[33:34, 0:8]
    b3 = sp[34:35, 0:4]
    b4 = sp[35:36, 0:2]
    b5 = sp[36:37, 0:2]

    # Layer 1 (MXU): Linear(input_dim, 32) + ReLU
    z1 = jnp.dot(x, w1_ref[...], preferred_element_type=jnp.float32) + b1
    h1 = jnp.maximum(z1, 0.0)
    out_ref[:, 0:32] = z1
    out_ref[:, 32:64] = h1

    # Layer 2 (MXU): Linear(32, 8) + ReLU
    z2 = jnp.dot(h1, w2, preferred_element_type=jnp.float32) + b2
    h2 = jnp.maximum(z2, 0.0)
    out_ref[:, 64:72] = z2
    out_ref[:, 72:80] = h2

    # Layer 3 (VPU): Linear(8, 4) + ReLU
    z3 = _vpu_linear(h2, w3, b3, 8)
    h3 = jnp.maximum(z3, 0.0)
    out_ref[:, 80:84] = z3
    out_ref[:, 84:88] = h3

    # Layer 4 (VPU): Linear(4, 2) + ReLU
    z4 = _vpu_linear(h3, w4, b4, 4)
    h4 = jnp.maximum(z4, 0.0)
    out_ref[:, 88:90] = z4
    out_ref[:, 90:92] = h4

    # Final layer (VPU): Linear(2, 2), no activation
    z5 = _vpu_linear(h4, w5, b5, 2)
    out_ref[:, 92:94] = z5

    # Keep the padding lanes defined.
    out_ref[:, 94:OUT_SLAB] = jnp.zeros((x.shape[0], OUT_SLAB - 94), jnp.float32)


def _pack_small_params(params):
    """Pack W2..W5 and b1..b5 into one (40, 128) f32 slab."""
    (_, b1), (w2, b2), (w3, b3), (w4, b4), (w5, b5) = params
    f32 = lambda a: jnp.asarray(a, jnp.float32)
    sp = jnp.zeros((SP_ROWS, OUT_SLAB), jnp.float32)
    sp = sp.at[0:32, 0:8].set(f32(w2))
    sp = sp.at[0:8, 8:12].set(f32(w3))
    sp = sp.at[0:4, 12:14].set(f32(w4))
    sp = sp.at[0:2, 14:16].set(f32(w5))
    sp = sp.at[32, 0:32].set(f32(b1)[0])
    sp = sp.at[33, 0:8].set(f32(b2)[0])
    sp = sp.at[34, 0:4].set(f32(b3)[0])
    sp = sp.at[35, 0:2].set(f32(b4)[0])
    sp = sp.at[36, 0:2].set(f32(b5)[0])
    return sp


def _choose_tile_b(batch8, in_pad):
    """Pick a batch tile: as big as VMEM comfortably allows (v7x-safe budget),
    whole batch for small inputs, >=2 tiles for large batches (megacore)."""
    budget = 24 * 1024 * 1024                 # conservative vs 32 MiB scoped VMEM
    per_row = (in_pad + OUT_SLAB) * 4 * 2     # x + out tiles, double-buffered
    cap = min(2048, max(8, (budget // per_row) // 8 * 8))
    if batch8 <= 512:
        return min(batch8, cap)
    # Large batch: at least 2 grid steps so both v7x TensorCores get work.
    return max(8, min(cap, _round_up(pl.cdiv(batch8, 2), 8)))


@jax.jit
def optimal_feature_learning_forward(x, params):
    """Runs the fused Pallas MLP.

    Args:
      x: (batch, input_dim) float32.
      params: list of 5 (W, b) pairs; W is (in, out), b is (1, out).

    Returns:
      (final_output, activations): 9 activations (5 linear, 4 ReLU outputs),
      final_output == activations[-1], matching the PyTorch module.
    """
    x = jnp.asarray(x, jnp.float32)
    batch, input_dim = x.shape

    # --- pad input features to a multiple of 128 (lane-aligned K) ---
    in_pad = _round_up(input_dim, 128)
    w1 = jnp.asarray(params[0][0], jnp.float32)
    if in_pad != input_dim:
        x = jnp.pad(x, ((0, 0), (0, in_pad - input_dim)))
        w1 = jnp.pad(w1, ((0, in_pad - input_dim), (0, 0)))
    sp = _pack_small_params(params)

    # --- batch tiling ---
    batch8 = _round_up(batch, 8)
    tile_b = _choose_tile_b(batch8, in_pad)
    n_tiles = pl.cdiv(batch8, tile_b)
    batch_pad = n_tiles * tile_b
    if batch_pad != batch:
        x = jnp.pad(x, ((0, batch_pad - batch), (0, 0)))

    out = pl.pallas_call(
        _mlp_kernel,
        out_shape=jax.ShapeDtypeStruct((batch_pad, OUT_SLAB), jnp.float32),
        grid=(n_tiles,),
        in_specs=[
            pl.BlockSpec((tile_b, in_pad), lambda i: (i, 0)),   # x (tiled)
            pl.BlockSpec((in_pad, 32), lambda i: (0, 0)),       # W1 (resident)
            pl.BlockSpec((SP_ROWS, OUT_SLAB), lambda i: (0, 0)),  # packed params
        ],
        out_specs=pl.BlockSpec((tile_b, OUT_SLAB), lambda i: (i, 0)),
        compiler_params=pltpu.CompilerParams(
            dimension_semantics=("parallel",)),
    )(x, w1, sp)

    # Split the packed slab back into the 9 activations.
    activations = []
    off = 0
    for w in ACT_WIDTHS:
        activations.append(out[:batch, off:off + w])
        off += w
    return activations[-1], activations


def init_params(key, input_dim):
    """Deterministic parameter init (PyTorch-Linear-like uniform fan-in)."""
    dims = [input_dim] + HIDDEN_DIMS + [OUT_DIM]
    params = []
    for li in range(5):
        din, dout = dims[li], dims[li + 1]
        key, kw, kb = jax.random.split(key, 3)
        bound = 1.0 / jnp.sqrt(float(din))
        w = jax.random.uniform(kw, (din, dout), jnp.float32, -bound, bound)
        b = jax.random.uniform(kb, (1, dout), jnp.float32, -bound, bound)
        params.append((w, b))
    return params


def reference_forward(x, params):
    """Plain-JAX reference matching the PyTorch module semantics."""
    activations = []
    h = x
    for li, (w, b) in enumerate(params):
        h = jnp.dot(h, w, precision=jax.lax.Precision.HIGHEST) + b[0]
        activations.append(h)
        if li < 4:  # ReLU after every layer except the final Linear
            h = jnp.maximum(h, 0.0)
            activations.append(h)
    return h, activations


if __name__ == "__main__":
    key = jax.random.PRNGKey(0)
    key, kx = jax.random.split(key)

    batch, input_dim = 64, 16
    x = jax.random.normal(kx, (batch, input_dim), jnp.float32)
    params = init_params(key, input_dim)

    out, acts = optimal_feature_learning_forward(x, params)
    out = jax.block_until_ready(out)
    acts = [jax.block_until_ready(a) for a in acts]

    # Correctness check vs. plain-JAX reference.
    ref_out, ref_acts = reference_forward(x, params)
    assert len(acts) == len(ref_acts) == 9
    assert jnp.allclose(out, ref_out, atol=1e-4, rtol=1e-4)
    for a, r in zip(acts, ref_acts):
        assert a.shape == r.shape
        assert jnp.allclose(a, r, atol=1e-4, rtol=1e-4)

    # TODO(synk): get_separating_margin (torch.cdist-based) is not part of
    # forward(); left unimplemented.
    print("KERNEL_OK")
</pallas_src>

<mosaic_0001>
module attributes {stable_mosaic.version = 11 : i64} {
  func.func @_mlp_kernel(%arg0: i32, %arg1: memref<64x128xf32, #tpu.memory_space<vmem>>, %arg2: memref<128x32xf32, #tpu.memory_space<vmem>>, %arg3: memref<40x128xf32, #tpu.memory_space<vmem>>, %arg4: memref<64x128xf32, #tpu.memory_space<vmem>>) attributes {dimension_semantics = [#tpu.dimension_semantics<parallel>], iteration_bounds = array<i64: 1>, scalar_prefetch = 0 : i64, scratch_operands = 0 : i64, tpu.core_type = #tpu.core_type<tc>, window_params = [{transform_indices = @transform_0, window_bounds = array<i64: 64, 128>}, {pipeline_mode = #tpu.pipeline_mode<synchronous>, transform_indices = @transform_1, window_bounds = array<i64: 128, 32>}, {pipeline_mode = #tpu.pipeline_mode<synchronous>, transform_indices = @transform_2, window_bounds = array<i64: 40, 128>}, {transform_indices = @transform_3, window_bounds = array<i64: 64, 128>}]} {
    %c0 = arith.constant 0 : index
    %c0_0 = arith.constant 0 : index
    %0 = vector.load %arg1[%c0, %c0_0] : memref<64x128xf32, #tpu.memory_space<vmem>>, vector<64x128xf32>
    %c0_1 = arith.constant 0 : index
    %c0_2 = arith.constant 0 : index
    %1 = vector.load %arg3[%c0_1, %c0_2] : memref<40x128xf32, #tpu.memory_space<vmem>>, vector<40x128xf32>
    %2 = vector.extract_strided_slice %1 {offsets = [0, 0], sizes = [32, 8], strides = [1, 1]} : vector<40x128xf32> to vector<32x8xf32>
    %3 = vector.extract_strided_slice %1 {offsets = [0, 8], sizes = [8, 4], strides = [1, 1]} : vector<40x128xf32> to vector<8x4xf32>
    %4 = vector.extract_strided_slice %1 {offsets = [0, 12], sizes = [4, 2], strides = [1, 1]} : vector<40x128xf32> to vector<4x2xf32>
    %5 = vector.extract_strided_slice %1 {offsets = [0, 14], sizes = [2, 2], strides = [1, 1]} : vector<40x128xf32> to vector<2x2xf32>
    %6 = vector.extract_strided_slice %1 {offsets = [32, 0], sizes = [1, 32], strides = [1, 1]} : vector<40x128xf32> to vector<1x32xf32>
    %7 = vector.extract_strided_slice %1 {offsets = [33, 0], sizes = [1, 8], strides = [1, 1]} : vector<40x128xf32> to vector<1x8xf32>
    %8 = vector.extract_strided_slice %1 {offsets = [34, 0], sizes = [1, 4], strides = [1, 1]} : vector<40x128xf32> to vector<1x4xf32>
    %9 = vector.extract_strided_slice %1 {offsets = [35, 0], sizes = [1, 2], strides = [1, 1]} : vector<40x128xf32> to vector<1x2xf32>
    %10 = vector.extract_strided_slice %1 {offsets = [36, 0], sizes = [1, 2], strides = [1, 1]} : vector<40x128xf32> to vector<1x2xf32>
    %c0_3 = arith.constant 0 : index
    %c0_4 = arith.constant 0 : index
    %11 = vector.load %arg2[%c0_3, %c0_4] : memref<128x32xf32, #tpu.memory_space<vmem>>, vector<128x32xf32>
    %cst = arith.constant dense<0.000000e+00> : vector<64x32xf32>
    %12 = tpu.matmul %0, %11, %cst {dimension_numbers = #tpu.dot_dimension_numbers<[1], [0], [0], [1], [0, 0, 1, 1], [], []>} : vector<64x128xf32>, vector<128x32xf32>, vector<64x32xf32> -> vector<64x32xf32>
    %13 = vector.broadcast %6 : vector<1x32xf32> to vector<64x32xf32>
    %14 = arith.addf %12, %13 : vector<64x32xf32>
    %cst_5 = arith.constant 0.000000e+00 : f32
    %15 = vector.broadcast %cst_5 : f32 to vector<64x32xf32>
    %16 = arith.maximumf %14, %15 : vector<64x32xf32>
    %c0_6 = arith.constant 0 : index
    %c0_7 = arith.constant 0 : index
    %17 = vector.load %arg4[%c0_6, %c0_7] : memref<64x128xf32, #tpu.memory_space<vmem>>, vector<64x32xf32>
    tpu.vector_store %arg4[%c0_6, %c0_7], %14 {strides = array<i32>} : memref<64x128xf32, #tpu.memory_space<vmem>>, vector<64x32xf32>,
    %c0_8 = arith.constant 0 : index
    %c32 = arith.constant 32 : index
    %18 = vector.load %arg4[%c0_8, %c32] : memref<64x128xf32, #tpu.memory_space<vmem>>, vector<64x32xf32>
    tpu.vector_store %arg4[%c0_8, %c32], %16 {strides = array<i32>} : memref<64x128xf32, #tpu.memory_space<vmem>>, vector<64x32xf32>,
    %cst_9 = arith.constant dense<0.000000e+00> : vector<64x8xf32>
    %19 = tpu.matmul %16, %2, %cst_9 {dimension_numbers = #tpu.dot_dimension_numbers<[1], [0], [0], [1], [0, 0, 1, 1], [], []>} : vector<64x32xf32>, vector<32x8xf32>, vector<64x8xf32> -> vector<64x8xf32>
    %20 = vector.broadcast %7 : vector<1x8xf32> to vector<64x8xf32>
    %21 = arith.addf %19, %20 : vector<64x8xf32>
    %cst_10 = arith.constant 0.000000e+00 : f32
    %22 = vector.broadcast %cst_10 : f32 to vector<64x8xf32>
    %23 = arith.maximumf %21, %22 : vector<64x8xf32>
    %c0_11 = arith.constant 0 : index
    %c64 = arith.constant 64 : index
    %24 = vector.load %arg4[%c0_11, %c64] : memref<64x128xf32, #tpu.memory_space<vmem>>, vector<64x8xf32>
    tpu.vector_store %arg4[%c0_11, %c64], %21 {strides = array<i32>} : memref<64x128xf32, #tpu.memory_space<vmem>>, vector<64x8xf32>,
    %c0_12 = arith.constant 0 : index
    %c72 = arith.constant 72 : index
    %25 = vector.load %arg4[%c0_12, %c72] : memref<64x128xf32, #tpu.memory_space<vmem>>, vector<64x8xf32>
    tpu.vector_store %arg4[%c0_12, %c72], %23 {strides = array<i32>} : memref<64x128xf32, #tpu.memory_space<vmem>>, vector<64x8xf32>,
    %26 = vector.extract_strided_slice %23 {offsets = [0, 0], sizes = [64, 1], strides = [1, 1]} : vector<64x8xf32> to vector<64x1xf32>
    %27 = vector.extract_strided_slice %3 {offsets = [0, 0], sizes = [1, 4], strides = [1, 1]} : vector<8x4xf32> to vector<1x4xf32>
    %28 = vector.broadcast %26 : vector<64x1xf32> to vector<64x4xf32>
    %29 = vector.broadcast %27 : vector<1x4xf32> to vector<64x4xf32>
    %30 = arith.mulf %28, %29 : vector<64x4xf32>
    %31 = vector.broadcast %8 : vector<1x4xf32> to vector<64x4xf32>
    %32 = arith.addf %30, %31 : vector<64x4xf32>
    %33 = vector.extract_strided_slice %23 {offsets = [0, 1], sizes = [64, 1], strides = [1, 1]} : vector<64x8xf32> to vector<64x1xf32>
    %34 = vector.extract_strided_slice %3 {offsets = [1, 0], sizes = [1, 4], strides = [1, 1]} : vector<8x4xf32> to vector<1x4xf32>
    %35 = vector.broadcast %33 : vector<64x1xf32> to vector<64x4xf32>
    %36 = vector.broadcast %34 : vector<1x4xf32> to vector<64x4xf32>
    %37 = arith.mulf %35, %36 : vector<64x4xf32>
    %38 = arith.addf %32, %37 : vector<64x4xf32>
    %39 = vector.extract_strided_slice %23 {offsets = [0, 2], sizes = [64, 1], strides = [1, 1]} : vector<64x8xf32> to vector<64x1xf32>
    %40 = vector.extract_strided_slice %3 {offsets = [2, 0], sizes = [1, 4], strides = [1, 1]} : vector<8x4xf32> to vector<1x4xf32>
    %41 = vector.broadcast %39 : vector<64x1xf32> to vector<64x4xf32>
    %42 = vector.broadcast %40 : vector<1x4xf32> to vector<64x4xf32>
    %43 = arith.mulf %41, %42 : vector<64x4xf32>
    %44 = arith.addf %38, %43 : vector<64x4xf32>
    %45 = vector.extract_strided_slice %23 {offsets = [0, 3], sizes = [64, 1], strides = [1, 1]} : vector<64x8xf32> to vector<64x1xf32>
    %46 = vector.extract_strided_slice %3 {offsets = [3, 0], sizes = [1, 4], strides = [1, 1]} : vector<8x4xf32> to vector<1x4xf32>
    %47 = vector.broadcast %45 : vector<64x1xf32> to vector<64x4xf32>
    %48 = vector.broadcast %46 : vector<1x4xf32> to vector<64x4xf32>
    %49 = arith.mulf %47, %48 : vector<64x4xf32>
    %50 = arith.addf %44, %49 : vector<64x4xf32>
    %51 = vector.extract_strided_slice %23 {offsets = [0, 4], sizes = [64, 1], strides = [1, 1]} : vector<64x8xf32> to vector<64x1xf32>
    %52 = vector.extract_strided_slice %3 {offsets = [4, 0], sizes = [1, 4], strides = [1, 1]} : vector<8x4xf32> to vector<1x4xf32>
    %53 = vector.broadcast %51 : vector<64x1xf32> to vector<64x4xf32>
    %54 = vector.broadcast %52 : vector<1x4xf32> to vector<64x4xf32>
    %55 = arith.mulf %53, %54 : vector<64x4xf32>
    %56 = arith.addf %50, %55 : vector<64x4xf32>
    %57 = vector.extract_strided_slice %23 {offsets = [0, 5], sizes = [64, 1], strides = [1, 1]} : vector<64x8xf32> to vector<64x1xf32>
    %58 = vector.extract_strided_slice %3 {offsets = [5, 0], sizes = [1, 4], strides = [1, 1]} : vector<8x4xf32> to vector<1x4xf32>
    %59 = vector.broadcast %57 : vector<64x1xf32> to vector<64x4xf32>
    %60 = vector.broadcast %58 : vector<1x4xf32> to vector<64x4xf32>
    %61 = arith.mulf %59, %60 : vector<64x4xf32>
    %62 = arith.addf %56, %61 : vector<64x4xf32>
    %63 = vector.extract_strided_slice %23 {offsets = [0, 6], sizes = [64, 1], strides = [1, 1]} : vector<64x8xf32> to vector<64x1xf32>
    %64 = vector.extract_strided_slice %3 {offsets = [6, 0], sizes = [1, 4], strides = [1, 1]} : vector<8x4xf32> to vector<1x4xf32>
    %65 = vector.broadcast %63 : vector<64x1xf32> to vector<64x4xf32>
    %66 = vector.broadcast %64 : vector<1x4xf32> to vector<64x4xf32>
    %67 = arith.mulf %65, %66 : vector<64x4xf32>
    %68 = arith.addf %62, %67 : vector<64x4xf32>
    %69 = vector.extract_strided_slice %23 {offsets = [0, 7], sizes = [64, 1], strides = [1, 1]} : vector<64x8xf32> to vector<64x1xf32>
    %70 = vector.extract_strided_slice %3 {offsets = [7, 0], sizes = [1, 4], strides = [1, 1]} : vector<8x4xf32> to vector<1x4xf32>
    %71 = vector.broadcast %69 : vector<64x1xf32> to vector<64x4xf32>
    %72 = vector.broadcast %70 : vector<1x4xf32> to vector<64x4xf32>
    %73 = arith.mulf %71, %72 : vector<64x4xf32>
    %74 = arith.addf %68, %73 : vector<64x4xf32>
    %cst_13 = arith.constant 0.000000e+00 : f32
    %75 = vector.broadcast %cst_13 : f32 to vector<64x4xf32>
    %76 = arith.maximumf %74, %75 : vector<64x4xf32>
    %c0_14 = arith.constant 0 : index
    %c80 = arith.constant 80 : index
    %77 = vector.load %arg4[%c0_14, %c80] : memref<64x128xf32, #tpu.memory_space<vmem>>, vector<64x4xf32>
    tpu.vector_store %arg4[%c0_14, %c80], %74 {strides = array<i32>} : memref<64x128xf32, #tpu.memory_space<vmem>>, vector<64x4xf32>,
    %c0_15 = arith.constant 0 : index
    %c84 = arith.constant 84 : index
    %78 = vector.load %arg4[%c0_15, %c84] : memref<64x128xf32, #tpu.memory_space<vmem>>, vector<64x4xf32>
    tpu.vector_store %arg4[%c0_15, %c84], %76 {strides = array<i32>} : memref<64x128xf32, #tpu.memory_space<vmem>>, vector<64x4xf32>,
    %79 = vector.extract_strided_slice %76 {offsets = [0, 0], sizes = [64, 1], strides = [1, 1]} : vector<64x4xf32> to vector<64x1xf32>
    %80 = vector.extract_strided_slice %4 {offsets = [0, 0], sizes = [1, 2], strides = [1, 1]} : vector<4x2xf32> to vector<1x2xf32>
    %81 = vector.broadcast %79 : vector<64x1xf32> to vector<64x2xf32>
    %82 = vector.broadcast %80 : vector<1x2xf32> to vector<64x2xf32>
    %83 = arith.mulf %81, %82 : vector<64x2xf32>
    %84 = vector.broadcast %9 : vector<1x2xf32> to vector<64x2xf32>
    %85 = arith.addf %83, %84 : vector<64x2xf32>
    %86 = vector.extract_strided_slice %76 {offsets = [0, 1], sizes = [64, 1], strides = [1, 1]} : vector<64x4xf32> to vector<64x1xf32>
    %87 = vector.extract_strided_slice %4 {offsets = [1, 0], sizes = [1, 2], strides = [1, 1]} : vector<4x2xf32> to vector<1x2xf32>
    %88 = vector.broadcast %86 : vector<64x1xf32> to vector<64x2xf32>
    %89 = vector.broadcast %87 : vector<1x2xf32> to vector<64x2xf32>
    %90 = arith.mulf %88, %89 : vector<64x2xf32>
    %91 = arith.addf %85, %90 : vector<64x2xf32>
    %92 = vector.extract_strided_slice %76 {offsets = [0, 2], sizes = [64, 1], strides = [1, 1]} : vector<64x4xf32> to vector<64x1xf32>
    %93 = vector.extract_strided_slice %4 {offsets = [2, 0], sizes = [1, 2], strides = [1, 1]} : vector<4x2xf32> to vector<1x2xf32>
    %94 = vector.broadcast %92 : vector<64x1xf32> to vector<64x2xf32>
    %95 = vector.broadcast %93 : vector<1x2xf32> to vector<64x2xf32>
    %96 = arith.mulf %94, %95 : vector<64x2xf32>
    %97 = arith.addf %91, %96 : vector<64x2xf32>
    %98 = vector.extract_strided_slice %76 {offsets = [0, 3], sizes = [64, 1], strides = [1, 1]} : vector<64x4xf32> to vector<64x1xf32>
    %99 = vector.extract_strided_slice %4 {offsets = [3, 0], sizes = [1, 2], strides = [1, 1]} : vector<4x2xf32> to vector<1x2xf32>
    %100 = vector.broadcast %98 : vector<64x1xf32> to vector<64x2xf32>
    %101 = vector.broadcast %99 : vector<1x2xf32> to vector<64x2xf32>
    %102 = arith.mulf %100, %101 : vector<64x2xf32>
    %103 = arith.addf %97, %102 : vector<64x2xf32>
    %cst_16 = arith.constant 0.000000e+00 : f32
    %104 = vector.broadcast %cst_16 : f32 to vector<64x2xf32>
    %105 = arith.maximumf %103, %104 : vector<64x2xf32>
    %c0_17 = arith.constant 0 : index
    %c88 = arith.constant 88 : index
    %106 = vector.load %arg4[%c0_17, %c88] : memref<64x128xf32, #tpu.memory_space<vmem>>, vector<64x2xf32>
    tpu.vector_store %arg4[%c0_17, %c88], %103 {strides = array<i32>} : memref<64x128xf32, #tpu.memory_space<vmem>>, vector<64x2xf32>,
    %c0_18 = arith.constant 0 : index
    %c90 = arith.constant 90 : index
    %107 = vector.load %arg4[%c0_18, %c90] : memref<64x128xf32, #tpu.memory_space<vmem>>, vector<64x2xf32>
    tpu.vector_store %arg4[%c0_18, %c90], %105 {strides = array<i32>} : memref<64x128xf32, #tpu.memory_space<vmem>>, vector<64x2xf32>,
    %108 = vector.extract_strided_slice %105 {offsets = [0, 0], sizes = [64, 1], strides = [1, 1]} : vector<64x2xf32> to vector<64x1xf32>
    %109 = vector.extract_strided_slice %5 {offsets = [0, 0], sizes = [1, 2], strides = [1, 1]} : vector<2x2xf32> to vector<1x2xf32>
    %110 = vector.broadcast %108 : vector<64x1xf32> to vector<64x2xf32>
    %111 = vector.broadcast %109 : vector<1x2xf32> to vector<64x2xf32>
    %112 = arith.mulf %110, %111 : vector<64x2xf32>
    %113 = vector.broadcast %10 : vector<1x2xf32> to vector<64x2xf32>
    %114 = arith.addf %112, %113 : vector<64x2xf32>
    %115 = vector.extract_strided_slice %105 {offsets = [0, 1], sizes = [64, 1], strides = [1, 1]} : vector<64x2xf32> to vector<64x1xf32>
    %116 = vector.extract_strided_slice %5 {offsets = [1, 0], sizes = [1, 2], strides = [1, 1]} : vector<2x2xf32> to vector<1x2xf32>
    %117 = vector.broadcast %115 : vector<64x1xf32> to vector<64x2xf32>
    %118 = vector.broadcast %116 : vector<1x2xf32> to vector<64x2xf32>
    %119 = arith.mulf %117, %118 : vector<64x2xf32>
    %120 = arith.addf %114, %119 : vector<64x2xf32>
    %c0_19 = arith.constant 0 : index
    %c92 = arith.constant 92 : index
    %121 = vector.load %arg4[%c0_19, %c92] : memref<64x128xf32, #tpu.memory_space<vmem>>, vector<64x2xf32>
    tpu.vector_store %arg4[%c0_19, %c92], %120 {strides = array<i32>} : memref<64x128xf32, #tpu.memory_space<vmem>>, vector<64x2xf32>,
    %cst_20 = arith.constant 0.000000e+00 : f32
    %122 = vector.broadcast %cst_20 : f32 to vector<64x34xf32>
    %c0_21 = arith.constant 0 : index
    %c94 = arith.constant 94 : index
    %123 = vector.load %arg4[%c0_21, %c94] : memref<64x128xf32, #tpu.memory_space<vmem>>, vector<64x34xf32>
    tpu.vector_store %arg4[%c0_21, %c94], %122 {strides = array<i32>} : memref<64x128xf32, #tpu.memory_space<vmem>>, vector<64x34xf32>,
    return
  }
  func.func @transform_0(%arg0: i32) -> (i32, i32) {
    %c0_i32 = arith.constant 0 : i32
    %c0_i32_0 = arith.constant 0 : i32
    return %arg0, %c0_i32 : i32, i32
  }
  func.func @transform_1(%arg0: i32) -> (i32, i32) {
    %c0_i32 = arith.constant 0 : i32
    %c0_i32_0 = arith.constant 0 : i32
    %c0_i32_1 = arith.constant 0 : i32
    return %c0_i32, %c0_i32_0 : i32, i32
  }
  func.func @transform_2(%arg0: i32) -> (i32, i32) {
    %c0_i32 = arith.constant 0 : i32
    %c0_i32_0 = arith.constant 0 : i32
    %c0_i32_1 = arith.constant 0 : i32
    return %c0_i32, %c0_i32_0 : i32, i32
  }
  func.func @transform_3(%arg0: i32) -> (i32, i32) {
    %c0_i32 = arith.constant 0 : i32
    %c0_i32_0 = arith.constant 0 : i32
    return %arg0, %c0_i32 : i32, i32
  }
}

</mosaic_0001>

<llo_original>
// kernel: optimal_feature_learning_forward.1
$region0: #{optimal_feature_learning_forward.1}
  #allocation0 [shape = 'u32[]', space=smem, size = 0x4, offset = 0x4, fixed_abs, tag = 'smem constant byte address 0x4 - core index']
  #allocation1 [shape = 'u32[72,128]{1,0:T(1,128)}', space=vmem, size = 0x9000, scoped, tag = 'internal scratch']
  %s0 = inlined_call_operand.vmem [shape: f32[64,128], index: 0, kind: input, shape index: {}]
  %s1 = inlined_call_operand.vmem [shape: f32[128,32], index: 1, kind: input, shape index: {}]
  %s2 = inlined_call_operand.vmem [shape: f32[40,128], index: 2, kind: input, shape index: {}]
  %s3 = inlined_call_operand.vmem [shape: f32[64,128], index: 3, kind: output, shape index: {}]
  %s4 = sld [smem:[#allocation0]]
  $region22: #{optimal_feature_learning_forward.1} parent=0
    _
  %s6 = ssub.s32 1, %s4
  %s7 = scalar_select 0, %s6, %s4
  // Predicated region
  $region2: #{optimal_feature_learning_forward.1} parent=0 // pred_check
    _
  $region3: #{optimal_feature_learning_forward.1} parent=0 // pred_check_branch
    %9 = sbr.rel (0) target = $region5
  $region4: #{optimal_feature_learning_forward.1} parent=0 // pred_region
    _
  $region5: #{optimal_feature_learning_forward.1} parent=0 // pred_fallthru
    _
  // Predicated region
  $region6: #{optimal_feature_learning_forward.1} parent=0 // pred_check
    _
  $region7: #{optimal_feature_learning_forward.1} parent=0 // pred_check_branch
    %11 = sbr.rel (0) target = $region9
  $region8: #{optimal_feature_learning_forward.1} parent=0 // pred_region
    _
  $region9: #{optimal_feature_learning_forward.1} parent=0 // pred_fallthru
    _
  // Predicated region
  $region10: #{optimal_feature_learning_forward.1} parent=0 // pred_check
    _
  $region11: #{optimal_feature_learning_forward.1} parent=0 // pred_check_branch
    %13 = sbr.rel (0) target = $region13
  $region12: #{optimal_feature_learning_forward.1} parent=0 // pred_region
    _
  $region13: #{optimal_feature_learning_forward.1} parent=0 // pred_fallthru
    _
  %v14 = vld [vmem:[%s0] sm:$0xff]
  %v15 = vld [vmem:[%s0 + $0x8] sm:$0xff]
  %v16 = vld [vmem:[%s0 + $0x10] sm:$0xff]
  %v17 = vld [vmem:[%s0 + $0x18] sm:$0xff]
  %v18 = vld [vmem:[%s0 + $0x20] sm:$0xff]
  %v19 = vld [vmem:[%s0 + $0x28] sm:$0xff]
  %v20 = vld [vmem:[%s0 + $0x30] sm:$0xff]
  %v21 = vld [vmem:[%s0 + $0x38] sm:$0xff]
  %v22 = vld [vmem:[%s2] sm:$0xff]
  %v23 = vld [vmem:[%s2 + $0x8] sm:$0xff]
  %v24 = vld [vmem:[%s2 + $0x10] sm:$0xff]
  %v25 = vld [vmem:[%s2 + $0x18] sm:$0xff]
  %v26 = vld [vmem:[%s2 + $0x20] sm:$0xff]
  %v27 = vld [vmem:[%s1] sm:$0xff]
  %v28 = vld [vmem:[%s1 + $0x8] sm:$0xff]
  %v29 = vld [vmem:[%s1 + $0x10] sm:$0xff]
  %v30 = vld [vmem:[%s1 + $0x18] sm:$0xff]
  %v31 = vld [vmem:[%s1 + $0x20] sm:$0xff]
  %v32 = vld [vmem:[%s1 + $0x28] sm:$0xff]
  %v33 = vld [vmem:[%s1 + $0x30] sm:$0xff]
  %v34 = vld [vmem:[%s1 + $0x38] sm:$0xff]
  %v35 = vld [vmem:[%s1 + $0x40] sm:$0xff]
  %v36 = vld [vmem:[%s1 + $0x48] sm:$0xff]
  %v37 = vld [vmem:[%s1 + $0x50] sm:$0xff]
  %v38 = vld [vmem:[%s1 + $0x58] sm:$0xff]
  %v39 = vld [vmem:[%s1 + $0x60] sm:$0xff]
  %v40 = vld [vmem:[%s1 + $0x68] sm:$0xff]
  %v41 = vld [vmem:[%s1 + $0x70] sm:$0xff]
  %v42 = vld [vmem:[%s1 + $0x78] sm:$0xff]
  %v43 = vperm.slane %v26, 0
  %44 = vmatpush.msra.mxu0 %v42
  %45 = vmatpush.msra.mxu0 %v41
  %46 = vmatpush.msra.mxu0 %v40
  %47 = vmatpush.msra.mxu0 %v39
  %48 = vmatpush.msra.mxu0 %v38
  %49 = vmatpush.msra.mxu0 %v37
  %50 = vmatpush.msra.mxu0 %v36
  %51 = vmatpush.msra.mxu0 %v35
  %52 = vmatpush.msra.mxu0 %v34
  %53 = vmatpush.msra.mxu0 %v33
  %54 = vmatpush.msra.mxu0 %v32
  %55 = vmatpush.msra.mxu0 %v31
  %56 = vmatpush.msra.mxu0 %v30
  %57 = vmatpush.msra.mxu0 %v29
  %58 = vmatpush.msra.mxu0 %v28
  %59 = vmatpush.msra.mxu0 %v27
  %60 = vmatmul.f32.gmra.mxu0 %v14
  %v61 = vpop.f32.mrf.mxu0
  %v62 = vadd.f32 %v43, %v61
  %63 = vmatmul.f32.gmra.mxu0 %v15
  %v64 = vpop.f32.mrf.mxu0
  %v65 = vadd.f32 %v43, %v64
  %66 = vmatmul.f32.gmra.mxu0 %v16
  %v67 = vpop.f32.mrf.mxu0
  %v68 = vadd.f32 %v43, %v67
  %69 = vmatmul.f32.gmra.mxu0 %v17
  %v70 = vpop.f32.mrf.mxu0
  %v71 = vadd.f32 %v43, %v70
  %72 = vmatmul.f32.gmra.mxu0 %v18
  %v73 = vpop.f32.mrf.mxu0
  %v74 = vadd.f32 %v43, %v73
  %75 = vmatmul.f32.gmra.mxu0 %v19
  %v76 = vpop.f32.mrf.mxu0
  %v77 = vadd.f32 %v43, %v76
  %78 = vmatmul.f32.gmra.mxu0 %v20
  %v79 = vpop.f32.mrf.mxu0
  %v80 = vadd.f32 %v43, %v79
  %81 = vmatmul.f32.gmra.mxu0 %v21
  %v82 = vpop.f32.mrf.mxu0
  %v83 = vadd.f32 %v43, %v82
  %84 = vdwg.mxu0
  %v85 = vmax.f32 %v62, 0.0
  %v86 = vmax.f32 %v65, 0.0
  %v87 = vmax.f32 %v68, 0.0
  %v88 = vmax.f32 %v71, 0.0
  %v89 = vmax.f32 %v74, 0.0
  %v90 = vmax.f32 %v77, 0.0
  %v91 = vmax.f32 %v80, 0.0
  %v92 = vmax.f32 %v83, 0.0
  %vm93 = vcmask 261120
  %94 = vst.msk [vmem:[%s3] sm:$0xff] %vm93, %v62
  %95 = vst.msk [vmem:[%s3 + $0x8] sm:$0xff] %vm93, %v65
  %96 = vst.msk [vmem:[%s3 + $0x10] sm:$0xff] %vm93, %v68
  %97 = vst.msk [vmem:[%s3 + $0x18] sm:$0xff] %vm93, %v71
  %98 = vst.msk [vmem:[%s3 + $0x20] sm:$0xff] %vm93, %v74
  %99 = vst.msk [vmem:[%s3 + $0x28] sm:$0xff] %vm93, %v77
  %100 = vst.msk [vmem:[%s3 + $0x30] sm:$0xff] %vm93, %v80
  %101 = vst.msk [vmem:[%s3 + $0x38] sm:$0xff] %vm93, %v83
  %110 = vrot.lane.b32.xlu0 %v85, 32
  %v111 = vpop.permute.xlu0 %110
  %112 = vrot.lane.b32.xlu0 %v86, 32
  %v113 = vpop.permute.xlu0 %112
  %114 = vrot.lane.b32.xlu0 %v87, 32
  %v115 = vpop.permute.xlu0 %114
  %116 = vrot.lane.b32.xlu0 %v88, 32
  %v117 = vpop.permute.xlu0 %116
  %118 = vrot.lane.b32.xlu0 %v89, 32
  %v119 = vpop.permute.xlu0 %118
  %120 = vrot.lane.b32.xlu0 %v90, 32
  %v121 = vpop.permute.xlu0 %120
  %122 = vrot.lane.b32.xlu0 %v91, 32
  %v123 = vpop.permute.xlu0 %122
  %124 = vrot.lane.b32.xlu0 %v92, 32
  %v125 = vpop.permute.xlu0 %124
  %vm134 = vcmask 523520
  %135 = vst.msk [vmem:[%s3] sm:$0xff] %vm134, %v111
  %136 = vst.msk [vmem:[%s3 + $0x8] sm:$0xff] %vm134, %v113
  %137 = vst.msk [vmem:[%s3 + $0x10] sm:$0xff] %vm134, %v115
  %138 = vst.msk [vmem:[%s3 + $0x18] sm:$0xff] %vm134, %v117
  %139 = vst.msk [vmem:[%s3 + $0x20] sm:$0xff] %vm134, %v119
  %140 = vst.msk [vmem:[%s3 + $0x28] sm:$0xff] %vm134, %v121
  %141 = vst.msk [vmem:[%s3 + $0x30] sm:$0xff] %vm134, %v123
  %142 = vst.msk [vmem:[%s3 + $0x38] sm:$0xff] %vm134, %v125
  %v143 = vperm.slane %v26, 1
  %v144 = vsel %vm93, %v85, 0
  %v146 = vsel %vm93, %v86, 0
  %v148 = vsel %vm93, %v87, 0
  %v150 = vsel %vm93, %v88, 0
  %v152 = vsel %vm93, %v89, 0
  %v154 = vsel %vm93, %v90, 0
  %v156 = vsel %vm93, %v91, 0
  %v158 = vsel %vm93, %v92, 0
  %160 = vmatpush.msra.mxu0 0.0
  %161 = vmatpush.msra.mxu0 0.0
  %162 = vmatpush.msra.mxu0 0.0
  %163 = vmatpush.msra.mxu0 0.0
  %164 = vmatpush.msra.mxu0 0.0
  %165 = vmatpush.msra.mxu0 0.0
  %166 = vmatpush.msra.mxu0 0.0
  %167 = vmatpush.msra.mxu0 0.0
  %168 = vmatpush.msra.mxu0 0.0
  %169 = vmatpush.msra.mxu0 0.0
  %170 = vmatpush.msra.mxu0 0.0
  %171 = vmatpush.msra.mxu0 0.0
  %172 = vmatpush.msra.mxu0 %v25
  %173 = vmatpush.msra.mxu0 %v24
  %174 = vmatpush.msra.mxu0 %v23
  %175 = vmatpush.msra.mxu0 %v22
  %176 = vmatmul.f32.gmra.mxu0 %v144
  %v177 = vpop.f32.mrf.mxu0
  %v178 = vadd.f32 %v143, %v177
  %179 = vmatmul.f32.gmra.mxu0 %v146
  %v180 = vpop.f32.mrf.mxu0
  %v181 = vadd.f32 %v143, %v180
  %182 = vmatmul.f32.gmra.mxu0 %v148
  %v183 = vpop.f32.mrf.mxu0
  %v184 = vadd.f32 %v143, %v183
  %185 = vmatmul.f32.gmra.mxu0 %v150
  %v186 = vpop.f32.mrf.mxu0
  %v187 = vadd.f32 %v143, %v186
  %188 = vmatmul.f32.gmra.mxu0 %v152
  %v189 = vpop.f32.mrf.mxu0
  %v190 = vadd.f32 %v143, %v189
  %191 = vmatmul.f32.gmra.mxu0 %v154
  %v192 = vpop.f32.mrf.mxu0
  %v193 = vadd.f32 %v143, %v192
  %194 = vmatmul.f32.gmra.mxu0 %v156
  %v195 = vpop.f32.mrf.mxu0
  %v196 = vadd.f32 %v143, %v195
  %197 = vmatmul.f32.gmra.mxu0 %v158
  %v198 = vpop.f32.mrf.mxu0
  %v199 = vadd.f32 %v143, %v198
  %200 = vdwg.mxu0
  %v201 = vmax.f32 %v178, 0.0
  %v202 = vmax.f32 %v181, 0.0
  %v203 = vmax.f32 %v184, 0.0
  %v204 = vmax.f32 %v187, 0.0
  %v205 = vmax.f32 %v190, 0.0
  %v206 = vmax.f32 %v193, 0.0
  %v207 = vmax.f32 %v196, 0.0
  %v208 = vmax.f32 %v199, 0.0
  %217 = vrot.lane.b32.xlu0 %v178, 64
  %v218 = vpop.permute.xlu0 %217
  %219 = vrot.lane.b32.xlu0 %v181, 64
  %v220 = vpop.permute.xlu0 %219
  %221 = vrot.lane.b32.xlu0 %v184, 64
  %v222 = vpop.permute.xlu0 %221
  %223 = vrot.lane.b32.xlu0 %v187, 64
  %v224 = vpop.permute.xlu0 %223
  %225 = vrot.lane.b32.xlu0 %v190, 64
  %v226 = vpop.permute.xlu0 %225
  %227 = vrot.lane.b32.xlu0 %v193, 64
  %v228 = vpop.permute.xlu0 %227
  %229 = vrot.lane.b32.xlu0 %v196, 64
  %v230 = vpop.permute.xlu0 %229
  %231 = vrot.lane.b32.xlu0 %v199, 64
  %v232 = vpop.permute.xlu0 %231
  %vm241 = vcmask 589312
  %242 = vst.msk [vmem:[%s3] sm:$0xff] %vm241, %v218
  %243 = vst.msk [vmem:[%s3 + $0x8] sm:$0xff] %vm241, %v220
  %244 = vst.msk [vmem:[%s3 + $0x10] sm:$0xff] %vm241, %v222
  %245 = vst.msk [vmem:[%s3 + $0x18] sm:$0xff] %vm241, %v224
  %246 = vst.msk [vmem:[%s3 + $0x20] sm:$0xff] %vm241, %v226
  %247 = vst.msk [vmem:[%s3 + $0x28] sm:$0xff] %vm241, %v228
  %248 = vst.msk [vmem:[%s3 + $0x30] sm:$0xff] %vm241, %v230
  %249 = vst.msk [vmem:[%s3 + $0x38] sm:$0xff] %vm241, %v232
  %258 = vrot.lane.b32.xlu0 %v201, 72
  %v259 = vpop.permute.xlu0 %258
  %260 = vrot.lane.b32.xlu0 %v202, 72
  %v261 = vpop.permute.xlu0 %260
  %262 = vrot.lane.b32.xlu0 %v203, 72
  %v263 = vpop.permute.xlu0 %262
  %264 = vrot.lane.b32.xlu0 %v204, 72
  %v265 = vpop.permute.xlu0 %264
  %266 = vrot.lane.b32.xlu0 %v205, 72
  %v267 = vpop.permute.xlu0 %266
  %268 = vrot.lane.b32.xlu0 %v206, 72
  %v269 = vpop.permute.xlu0 %268
  %270 = vrot.lane.b32.xlu0 %v207, 72
  %v271 = vpop.permute.xlu0 %270
  %272 = vrot.lane.b32.xlu0 %v208, 72
  %v273 = vpop.permute.xlu0 %272
  %vm282 = vcmask 654912
  %283 = vst.msk [vmem:[%s3] sm:$0xff] %vm282, %v259
  %284 = vst.msk [vmem:[%s3 + $0x8] sm:$0xff] %vm282, %v261
  %285 = vst.msk [vmem:[%s3 + $0x10] sm:$0xff] %vm282, %v263
  %286 = vst.msk [vmem:[%s3 + $0x18] sm:$0xff] %vm282, %v265
  %287 = vst.msk [vmem:[%s3 + $0x20] sm:$0xff] %vm282, %v267
  %288 = vst.msk [vmem:[%s3 + $0x28] sm:$0xff] %vm282, %v269
  %289 = vst.msk [vmem:[%s3 + $0x30] sm:$0xff] %vm282, %v271
  %290 = vst.msk [vmem:[%s3 + $0x38] sm:$0xff] %vm282, %v273
  %291 = vset.pattern.permute.xlu0 0
  %292 = vperm.xlu0 %291, %v201
  %v293 = vpop.permute.xlu0 %292
  %295 = vset.pattern.permute.xlu0 0
  %296 = vperm.xlu0 %295, %v202
  %v297 = vpop.permute.xlu0 %296
  %299 = vset.pattern.permute.xlu0 0
  %300 = vperm.xlu0 %299, %v203
  %v301 = vpop.permute.xlu0 %300
  %303 = vset.pattern.permute.xlu0 0
  %304 = vperm.xlu0 %303, %v204
  %v305 = vpop.permute.xlu0 %304
  %307 = vset.pattern.permute.xlu0 0
  %308 = vperm.xlu0 %307, %v205
  %v309 = vpop.permute.xlu0 %308
  %311 = vset.pattern.permute.xlu0 0
  %312 = vperm.xlu0 %311, %v206
  %v313 = vpop.permute.xlu0 %312
  %315 = vset.pattern.permute.xlu0 0
  %316 = vperm.xlu0 %315, %v207
  %v317 = vpop.permute.xlu0 %316
  %319 = vset.pattern.permute.xlu0 0
  %320 = vperm.xlu0 %319, %v208
  %v321 = vpop.permute.xlu0 %320
  %v323 = vperm.slane %v22, 0
  %v324 = vmul.f32 %v293, %v323
  %v325 = vmul.f32 %v297, %v323
  %v326 = vmul.f32 %v301, %v323
  %v327 = vmul.f32 %v305, %v323
  %v328 = vmul.f32 %v309, %v323
  %v329 = vmul.f32 %v313, %v323
  %v330 = vmul.f32 %v317, %v323
  %v331 = vmul.f32 %v321, %v323
  %v332 = vperm.slane %v26, 2
  %334 = vrot.lane.b32.xlu0 %v332, 8
  %v335 = vpop.permute.xlu0 %334
  %v337 = vadd.f32 %v324, %v335
  %v338 = vadd.f32 %v325, %v335
  %v339 = vadd.f32 %v326, %v335
  %v340 = vadd.f32 %v327, %v335
  %v341 = vadd.f32 %v328, %v335
  %v342 = vadd.f32 %v329, %v335
  %v343 = vadd.f32 %v330, %v335
  %v344 = vadd.f32 %v331, %v335
  %345 = vset.pattern.permute.xlu0 1
  %346 = vperm.xlu0 %345, %v201
  %v347 = vpop.permute.xlu0 %346
  %349 = vset.pattern.permute.xlu0 1
  %350 = vperm.xlu0 %349, %v202
  %v351 = vpop.permute.xlu0 %350
  %353 = vset.pattern.permute.xlu0 1
  %354 = vperm.xlu0 %353, %v203
  %v355 = vpop.permute.xlu0 %354
  %357 = vset.pattern.permute.xlu0 1
  %358 = vperm.xlu0 %357, %v204
  %v359 = vpop.permute.xlu0 %358
  %361 = vset.pattern.permute.xlu0 1
  %362 = vperm.xlu0 %361, %v205
  %v363 = vpop.permute.xlu0 %362
  %365 = vset.pattern.permute.xlu0 1
  %366 = vperm.xlu0 %365, %v206
  %v367 = vpop.permute.xlu0 %366
  %369 = vset.pattern.permute.xlu0 1
  %370 = vperm.xlu0 %369, %v207
  %v371 = vpop.permute.xlu0 %370
  %373 = vset.pattern.permute.xlu0 1
  %374 = vperm.xlu0 %373, %v208
  %v375 = vpop.permute.xlu0 %374
  %v377 = vperm.slane %v22, 1
  %v378 = vmul.f32 %v347, %v377
  %v379 = vmul.f32 %v351, %v377
  %v380 = vmul.f32 %v355, %v377
  %v381 = vmul.f32 %v359, %v377
  %v382 = vmul.f32 %v363, %v377
  %v383 = vmul.f32 %v367, %v377
  %v384 = vmul.f32 %v371, %v377
  %v385 = vmul.f32 %v375, %v377
  %v386 = vadd.f32 %v337, %v378
  %v387 = vadd.f32 %v338, %v379
  %v388 = vadd.f32 %v339, %v380
  %v389 = vadd.f32 %v340, %v381
  %v390 = vadd.f32 %v341, %v382
  %v391 = vadd.f32 %v342, %v383
  %v392 = vadd.f32 %v343, %v384
  %v393 = vadd.f32 %v344, %v385
  %394 = vset.pattern.permute.xlu0 2
  %395 = vperm.xlu0 %394, %v201
  %v396 = vpop.permute.xlu0 %395
  %398 = vset.pattern.permute.xlu0 2
  %399 = vperm.xlu0 %398, %v202
  %v400 = vpop.permute.xlu0 %399
  %402 = vset.pattern.permute.xlu0 2
  %403 = vperm.xlu0 %402, %v203
  %v404 = vpop.permute.xlu0 %403
  %406 = vset.pattern.permute.xlu0 2
  %407 = vperm.xlu0 %406, %v204
  %v408 = vpop.permute.xlu0 %407
  %410 = vset.pattern.permute.xlu0 2
  %411 = vperm.xlu0 %410, %v205
  %v412 = vpop.permute.xlu0 %411
  %414 = vset.pattern.permute.xlu0 2
  %415 = vperm.xlu0 %414, %v206
  %v416 = vpop.permute.xlu0 %415
  %418 = vset.pattern.permute.xlu0 2
  %419 = vperm.xlu0 %418, %v207
  %v420 = vpop.permute.xlu0 %419
  %422 = vset.pattern.permute.xlu0 2
  %423 = vperm.xlu0 %422, %v208
  %v424 = vpop.permute.xlu0 %423
  %v426 = vperm.slane %v22, 2
  %v427 = vmul.f32 %v396, %v426
  %v428 = vmul.f32 %v400, %v426
  %v429 = vmul.f32 %v404, %v426
  %v430 = vmul.f32 %v408, %v426
  %v431 = vmul.f32 %v412, %v426
  %v432 = vmul.f32 %v416, %v426
  %v433 = vmul.f32 %v420, %v426
  %v434 = vmul.f32 %v424, %v426
  %v435 = vadd.f32 %v386, %v427
  %v436 = vadd.f32 %v387, %v428
  %v437 = vadd.f32 %v388, %v429
  %v438 = vadd.f32 %v389, %v430
  %v439 = vadd.f32 %v390, %v431
  %v440 = vadd.f32 %v391, %v432
  %v441 = vadd.f32 %v392, %v433
  %v442 = vadd.f32 %v393, %v434
  %443 = vset.pattern.permute.xlu0 3
  %444 = vperm.xlu0 %443, %v201
  %v445 = vpop.permute.xlu0 %444
  %447 = vset.pattern.permute.xlu0 3
  %448 = vperm.xlu0 %447, %v202
  %v449 = vpop.permute.xlu0 %448
  %451 = vset.pattern.permute.xlu0 3
  %452 = vperm.xlu0 %451, %v203
  %v453 = vpop.permute.xlu0 %452
  %455 = vset.pattern.permute.xlu0 3
  %456 = vperm.xlu0 %455, %v204
  %v457 = vpop.permute.xlu0 %456
  %459 = vset.pattern.permute.xlu0 3
  %460 = vperm.xlu0 %459, %v205
  %v461 = vpop.permute.xlu0 %460
  %463 = vset.pattern.permute.xlu0 3
  %464 = vperm.xlu0 %463, %v206
  %v465 = vpop.permute.xlu0 %464
  %467 = vset.pattern.permute.xlu0 3
  %468 = vperm.xlu0 %467, %v207
  %v469 = vpop.permute.xlu0 %468
  %471 = vset.pattern.permute.xlu0 3
  %472 = vperm.xlu0 %471, %v208
  %v473 = vpop.permute.xlu0 %472
  %v475 = vperm.slane %v22, 3
  %v476 = vmul.f32 %v445, %v475
  %v477 = vmul.f32 %v449, %v475
  %v478 = vmul.f32 %v453, %v475
  %v479 = vmul.f32 %v457, %v475
  %v480 = vmul.f32 %v461, %v475
  %v481 = vmul.f32 %v465, %v475
  %v482 = vmul.f32 %v469, %v475
  %v483 = vmul.f32 %v473, %v475
  %v484 = vadd.f32 %v435, %v476
  %v485 = vadd.f32 %v436, %v477
  %v486 = vadd.f32 %v437, %v478
  %v487 = vadd.f32 %v438, %v479
  %v488 = vadd.f32 %v439, %v480
  %v489 = vadd.f32 %v440, %v481
  %v490 = vadd.f32 %v441, %v482
  %v491 = vadd.f32 %v442, %v483
  %492 = vset.pattern.permute.xlu0 4
  %493 = vperm.xlu0 %492, %v201
  %v494 = vpop.permute.xlu0 %493
  %496 = vset.pattern.permute.xlu0 4
  %497 = vperm.xlu0 %496, %v202
  %v498 = vpop.permute.xlu0 %497
  %500 = vset.pattern.permute.xlu0 4
  %501 = vperm.xlu0 %500, %v203
  %v502 = vpop.permute.xlu0 %501
  %504 = vset.pattern.permute.xlu0 4
  %505 = vperm.xlu0 %504, %v204
  %v506 = vpop.permute.xlu0 %505
  %508 = vset.pattern.permute.xlu0 4
  %509 = vperm.xlu0 %508, %v205
  %v510 = vpop.permute.xlu0 %509
  %512 = vset.pattern.permute.xlu0 4
  %513 = vperm.xlu0 %512, %v206
  %v514 = vpop.permute.xlu0 %513
  %516 = vset.pattern.permute.xlu0 4
  %517 = vperm.xlu0 %516, %v207
  %v518 = vpop.permute.xlu0 %517
  %520 = vset.pattern.permute.xlu0 4
  %521 = vperm.xlu0 %520, %v208
  %v522 = vpop.permute.xlu0 %521
  %v524 = vperm.slane %v22, 4
  %v525 = vmul.f32 %v494, %v524
  %v526 = vmul.f32 %v498, %v524
  %v527 = vmul.f32 %v502, %v524
  %v528 = vmul.f32 %v506, %v524
  %v529 = vmul.f32 %v510, %v524
  %v530 = vmul.f32 %v514, %v524
  %v531 = vmul.f32 %v518, %v524
  %v532 = vmul.f32 %v522, %v524
  %v533 = vadd.f32 %v484, %v525
  %v534 = vadd.f32 %v485, %v526
  %v535 = vadd.f32 %v486, %v527
  %v536 = vadd.f32 %v487, %v528
  %v537 = vadd.f32 %v488, %v529
  %v538 = vadd.f32 %v489, %v530
  %v539 = vadd.f32 %v490, %v531
  %v540 = vadd.f32 %v491, %v532
  %541 = vset.pattern.permute.xlu0 5
  %542 = vperm.xlu0 %541, %v201
  %v543 = vpop.permute.xlu0 %542
  %545 = vset.pattern.permute.xlu0 5
  %546 = vperm.xlu0 %545, %v202
  %v547 = vpop.permute.xlu0 %546
  %549 = vset.pattern.permute.xlu0 5
  %550 = vperm.xlu0 %549, %v203
  %v551 = vpop.permute.xlu0 %550
  %553 = vset.pattern.permute.xlu0 5
  %554 = vperm.xlu0 %553, %v204
  %v555 = vpop.permute.xlu0 %554
  %557 = vset.pattern.permute.xlu0 5
  %558 = vperm.xlu0 %557, %v205
  %v559 = vpop.permute.xlu0 %558
  %561 = vset.pattern.permute.xlu0 5
  %562 = vperm.xlu0 %561, %v206
  %v563 = vpop.permute.xlu0 %562
  %565 = vset.pattern.permute.xlu0 5
  %566 = vperm.xlu0 %565, %v207
  %v567 = vpop.permute.xlu0 %566
  %569 = vset.pattern.permute.xlu0 5
  %570 = vperm.xlu0 %569, %v208
  %v571 = vpop.permute.xlu0 %570
  %v573 = vperm.slane %v22, 5
  %v574 = vmul.f32 %v543, %v573
  %v575 = vmul.f32 %v547, %v573
  %v576 = vmul.f32 %v551, %v573
  %v577 = vmul.f32 %v555, %v573
  %v578 = vmul.f32 %v559, %v573
  %v579 = vmul.f32 %v563, %v573
  %v580 = vmul.f32 %v567, %v573
  %v581 = vmul.f32 %v571, %v573
  %v582 = vadd.f32 %v533, %v574
  %v583 = vadd.f32 %v534, %v575
  %v584 = vadd.f32 %v535, %v576
  %v585 = vadd.f32 %v536, %v577
  %v586 = vadd.f32 %v537, %v578
  %v587 = vadd.f32 %v538, %v579
  %v588 = vadd.f32 %v539, %v580
  %v589 = vadd.f32 %v540, %v581
  %590 = vset.pattern.permute.xlu0 6
  %591 = vperm.xlu0 %590, %v201
  %v592 = vpop.permute.xlu0 %591
  %594 = vset.pattern.permute.xlu0 6
  %595 = vperm.xlu0 %594, %v202
  %v596 = vpop.permute.xlu0 %595
  %598 = vset.pattern.permute.xlu0 6
  %599 = vperm.xlu0 %598, %v203
  %v600 = vpop.permute.xlu0 %599
  %602 = vset.pattern.permute.xlu0 6
  %603 = vperm.xlu0 %602, %v204
  %v604 = vpop.permute.xlu0 %603
  %606 = vset.pattern.permute.xlu0 6
  %607 = vperm.xlu0 %606, %v205
  %v608 = vpop.permute.xlu0 %607
  %610 = vset.pattern.permute.xlu0 6
  %611 = vperm.xlu0 %610, %v206
  %v612 = vpop.permute.xlu0 %611
  %614 = vset.pattern.permute.xlu0 6
  %615 = vperm.xlu0 %614, %v207
  %v616 = vpop.permute.xlu0 %615
  %618 = vset.pattern.permute.xlu0 6
  %619 = vperm.xlu0 %618, %v208
  %v620 = vpop.permute.xlu0 %619
  %v622 = vperm.slane %v22, 6
  %v623 = vmul.f32 %v592, %v622
  %v624 = vmul.f32 %v596, %v622
  %v625 = vmul.f32 %v600, %v622
  %v626 = vmul.f32 %v604, %v622
  %v627 = vmul.f32 %v608, %v622
  %v628 = vmul.f32 %v612, %v622
  %v629 = vmul.f32 %v616, %v622
  %v630 = vmul.f32 %v620, %v622
  %v631 = vadd.f32 %v582, %v623
  %v632 = vadd.f32 %v583, %v624
  %v633 = vadd.f32 %v584, %v625
  %v634 = vadd.f32 %v585, %v626
  %v635 = vadd.f32 %v586, %v627
  %v636 = vadd.f32 %v587, %v628
  %v637 = vadd.f32 %v588, %v629
  %v638 = vadd.f32 %v589, %v630
  %639 = vset.pattern.permute.xlu0 7
  %640 = vperm.xlu0 %639, %v201
  %v641 = vpop.permute.xlu0 %640
  %643 = vset.pattern.permute.xlu0 7
  %644 = vperm.xlu0 %643, %v202
  %v645 = vpop.permute.xlu0 %644
  %647 = vset.pattern.permute.xlu0 7
  %648 = vperm.xlu0 %647, %v203
  %v649 = vpop.permute.xlu0 %648
  %651 = vset.pattern.permute.xlu0 7
  %652 = vperm.xlu0 %651, %v204
  %v653 = vpop.permute.xlu0 %652
  %655 = vset.pattern.permute.xlu0 7
  %656 = vperm.xlu0 %655, %v205
  %v657 = vpop.permute.xlu0 %656
  %659 = vset.pattern.permute.xlu0 7
  %660 = vperm.xlu0 %659, %v206
  %v661 = vpop.permute.xlu0 %660
  %663 = vset.pattern.permute.xlu0 7
  %664 = vperm.xlu0 %663, %v207
  %v665 = vpop.permute.xlu0 %664
  %667 = vset.pattern.permute.xlu0 7
  %668 = vperm.xlu0 %667, %v208
  %v669 = vpop.permute.xlu0 %668
  %v671 = vperm.slane %v22, 7
  %v672 = vmul.f32 %v641, %v671
  %v673 = vmul.f32 %v645, %v671
  %v674 = vmul.f32 %v649, %v671
  %v675 = vmul.f32 %v653, %v671
  %v676 = vmul.f32 %v657, %v671
  %v677 = vmul.f32 %v661, %v671
  %v678 = vmul.f32 %v665, %v671
  %v679 = vmul.f32 %v669, %v671
  %v680 = vadd.f32 %v631, %v672
  %v681 = vadd.f32 %v632, %v673
  %v682 = vadd.f32 %v633, %v674
  %v683 = vadd.f32 %v634, %v675
  %v684 = vadd.f32 %v635, %v676
  %v685 = vadd.f32 %v636, %v677
  %v686 = vadd.f32 %v637, %v678
  %v687 = vadd.f32 %v638, %v679
  %v688 = vmax.f32 %v680, 0.0
  %v689 = vmax.f32 %v681, 0.0
  %v690 = vmax.f32 %v682, 0.0
  %v691 = vmax.f32 %v683, 0.0
  %v692 = vmax.f32 %v684, 0.0
  %v693 = vmax.f32 %v685, 0.0
  %v694 = vmax.f32 %v686, 0.0
  %v695 = vmax.f32 %v687, 0.0
  %704 = vrot.lane.b32.xlu0 %v680, 72
  %v705 = vpop.permute.xlu0 %704
  %706 = vrot.lane.b32.xlu0 %v681, 72
  %v707 = vpop.permute.xlu0 %706
  %708 = vrot.lane.b32.xlu0 %v682, 72
  %v709 = vpop.permute.xlu0 %708
  %710 = vrot.lane.b32.xlu0 %v683, 72
  %v711 = vpop.permute.xlu0 %710
  %712 = vrot.lane.b32.xlu0 %v684, 72
  %v713 = vpop.permute.xlu0 %712
  %714 = vrot.lane.b32.xlu0 %v685, 72
  %v715 = vpop.permute.xlu0 %714
  %716 = vrot.lane.b32.xlu0 %v686, 72
  %v717 = vpop.permute.xlu0 %716
  %718 = vrot.lane.b32.xlu0 %v687, 72
  %v719 = vpop.permute.xlu0 %718
  %vm728 = vcmask 687744
  %729 = vst.msk [vmem:[%s3] sm:$0xff] %vm728, %v705
  %730 = vst.msk [vmem:[%s3 + $0x8] sm:$0xff] %vm728, %v707
  %731 = vst.msk [vmem:[%s3 + $0x10] sm:$0xff] %vm728, %v709
  %732 = vst.msk [vmem:[%s3 + $0x18] sm:$0xff] %vm728, %v711
  %733 = vst.msk [vmem:[%s3 + $0x20] sm:$0xff] %vm728, %v713
  %734 = vst.msk [vmem:[%s3 + $0x28] sm:$0xff] %vm728, %v715
  %735 = vst.msk [vmem:[%s3 + $0x30] sm:$0xff] %vm728, %v717
  %736 = vst.msk [vmem:[%s3 + $0x38] sm:$0xff] %vm728, %v719
  %745 = vrot.lane.b32.xlu0 %v688, 76
  %v746 = vpop.permute.xlu0 %745
  %747 = vrot.lane.b32.xlu0 %v689, 76
  %v748 = vpop.permute.xlu0 %747
  %749 = vrot.lane.b32.xlu0 %v690, 76
  %v750 = vpop.permute.xlu0 %749
  %751 = vrot.lane.b32.xlu0 %v691, 76
  %v752 = vpop.permute.xlu0 %751
  %753 = vrot.lane.b32.xlu0 %v692, 76
  %v754 = vpop.permute.xlu0 %753
  %755 = vrot.lane.b32.xlu0 %v693, 76
  %v756 = vpop.permute.xlu0 %755
  %757 = vrot.lane.b32.xlu0 %v694, 76
  %v758 = vpop.permute.xlu0 %757
  %759 = vrot.lane.b32.xlu0 %v695, 76
  %v760 = vpop.permute.xlu0 %759
  %vm769 = vcmask 720544
  %770 = vst.msk [vmem:[%s3] sm:$0xff] %vm769, %v746
  %771 = vst.msk [vmem:[%s3 + $0x8] sm:$0xff] %vm769, %v748
  %772 = vst.msk [vmem:[%s3 + $0x10] sm:$0xff] %vm769, %v750
  %773 = vst.msk [vmem:[%s3 + $0x18] sm:$0xff] %vm769, %v752
  %774 = vst.msk [vmem:[%s3 + $0x20] sm:$0xff] %vm769, %v754
  %775 = vst.msk [vmem:[%s3 + $0x28] sm:$0xff] %vm769, %v756
  %776 = vst.msk [vmem:[%s3 + $0x30] sm:$0xff] %vm769, %v758
  %777 = vst.msk [vmem:[%s3 + $0x38] sm:$0xff] %vm769, %v760
  %778 = vset.pattern.permute.xlu0 8
  %779 = vperm.xlu0 %778, %v688
  %v780 = vpop.permute.xlu0 %779
  %782 = vset.pattern.permute.xlu0 8
  %783 = vperm.xlu0 %782, %v689
  %v784 = vpop.permute.xlu0 %783
  %786 = vset.pattern.permute.xlu0 8
  %787 = vperm.xlu0 %786, %v690
  %v788 = vpop.permute.xlu0 %787
  %790 = vset.pattern.permute.xlu0 8
  %791 = vperm.xlu0 %790, %v691
  %v792 = vpop.permute.xlu0 %791
  %794 = vset.pattern.permute.xlu0 8
  %795 = vperm.xlu0 %794, %v692
  %v796 = vpop.permute.xlu0 %795
  %798 = vset.pattern.permute.xlu0 8
  %799 = vperm.xlu0 %798, %v693
  %v800 = vpop.permute.xlu0 %799
  %802 = vset.pattern.permute.xlu0 8
  %803 = vperm.xlu0 %802, %v694
  %v804 = vpop.permute.xlu0 %803
  %806 = vset.pattern.permute.xlu0 8
  %807 = vperm.xlu0 %806, %v695
  %v808 = vpop.permute.xlu0 %807
  %v810 = vmul.f32 %v780, %v323
  %v811 = vmul.f32 %v784, %v323
  %v812 = vmul.f32 %v788, %v323
  %v813 = vmul.f32 %v792, %v323
  %v814 = vmul.f32 %v796, %v323
  %v815 = vmul.f32 %v800, %v323
  %v816 = vmul.f32 %v804, %v323
  %v817 = vmul.f32 %v808, %v323
  %v818 = vperm.slane %v26, 3
  %820 = vrot.lane.b32.xlu0 %v818, 12
  %v821 = vpop.permute.xlu0 %820
  %v823 = vadd.f32 %v810, %v821
  %v824 = vadd.f32 %v811, %v821
  %v825 = vadd.f32 %v812, %v821
  %v826 = vadd.f32 %v813, %v821
  %v827 = vadd.f32 %v814, %v821
  %v828 = vadd.f32 %v815, %v821
  %v829 = vadd.f32 %v816, %v821
  %v830 = vadd.f32 %v817, %v821
  %831 = vset.pattern.permute.xlu0 9
  %832 = vperm.xlu0 %831, %v688
  %v833 = vpop.permute.xlu0 %832
  %835 = vset.pattern.permute.xlu0 9
  %836 = vperm.xlu0 %835, %v689
  %v837 = vpop.permute.xlu0 %836
  %839 = vset.pattern.permute.xlu0 9
  %840 = vperm.xlu0 %839, %v690
  %v841 = vpop.permute.xlu0 %840
  %843 = vset.pattern.permute.xlu0 9
  %844 = vperm.xlu0 %843, %v691
  %v845 = vpop.permute.xlu0 %844
  %847 = vset.pattern.permute.xlu0 9
  %848 = vperm.xlu0 %847, %v692
  %v849 = vpop.permute.xlu0 %848
  %851 = vset.pattern.permute.xlu0 9
  %852 = vperm.xlu0 %851, %v693
  %v853 = vpop.permute.xlu0 %852
  %855 = vset.pattern.permute.xlu0 9
  %856 = vperm.xlu0 %855, %v694
  %v857 = vpop.permute.xlu0 %856
  %859 = vset.pattern.permute.xlu0 9
  %860 = vperm.xlu0 %859, %v695
  %v861 = vpop.permute.xlu0 %860
  %v863 = vmul.f32 %v833, %v377
  %v864 = vmul.f32 %v837, %v377
  %v865 = vmul.f32 %v841, %v377
  %v866 = vmul.f32 %v845, %v377
  %v867 = vmul.f32 %v849, %v377
  %v868 = vmul.f32 %v853, %v377
  %v869 = vmul.f32 %v857, %v377
  %v870 = vmul.f32 %v861, %v377
  %v871 = vadd.f32 %v823, %v863
  %v872 = vadd.f32 %v824, %v864
  %v873 = vadd.f32 %v825, %v865
  %v874 = vadd.f32 %v826, %v866
  %v875 = vadd.f32 %v827, %v867
  %v876 = vadd.f32 %v828, %v868
  %v877 = vadd.f32 %v829, %v869
  %v878 = vadd.f32 %v830, %v870
  %879 = vset.pattern.permute.xlu0 10
  %880 = vperm.xlu0 %879, %v688
  %v881 = vpop.permute.xlu0 %880
  %883 = vset.pattern.permute.xlu0 10
  %884 = vperm.xlu0 %883, %v689
  %v885 = vpop.permute.xlu0 %884
  %887 = vset.pattern.permute.xlu0 10
  %888 = vperm.xlu0 %887, %v690
  %v889 = vpop.permute.xlu0 %888
  %891 = vset.pattern.permute.xlu0 10
  %892 = vperm.xlu0 %891, %v691
  %v893 = vpop.permute.xlu0 %892
  %895 = vset.pattern.permute.xlu0 10
  %896 = vperm.xlu0 %895, %v692
  %v897 = vpop.permute.xlu0 %896
  %899 = vset.pattern.permute.xlu0 10
  %900 = vperm.xlu0 %899, %v693
  %v901 = vpop.permute.xlu0 %900
  %903 = vset.pattern.permute.xlu0 10
  %904 = vperm.xlu0 %903, %v694
  %v905 = vpop.permute.xlu0 %904
  %907 = vset.pattern.permute.xlu0 10
  %908 = vperm.xlu0 %907, %v695
  %v909 = vpop.permute.xlu0 %908
  %v911 = vmul.f32 %v881, %v426
  %v912 = vmul.f32 %v885, %v426
  %v913 = vmul.f32 %v889, %v426
  %v914 = vmul.f32 %v893, %v426
  %v915 = vmul.f32 %v897, %v426
  %v916 = vmul.f32 %v901, %v426
  %v917 = vmul.f32 %v905, %v426
  %v918 = vmul.f32 %v909, %v426
  %v919 = vadd.f32 %v871, %v911
  %v920 = vadd.f32 %v872, %v912
  %v921 = vadd.f32 %v873, %v913
  %v922 = vadd.f32 %v874, %v914
  %v923 = vadd.f32 %v875, %v915
  %v924 = vadd.f32 %v876, %v916
  %v925 = vadd.f32 %v877, %v917
  %v926 = vadd.f32 %v878, %v918
  %927 = vset.pattern.permute.xlu0 11
  %928 = vperm.xlu0 %927, %v688
  %v929 = vpop.permute.xlu0 %928
  %931 = vset.pattern.permute.xlu0 11
  %932 = vperm.xlu0 %931, %v689
  %v933 = vpop.permute.xlu0 %932
  %935 = vset.pattern.permute.xlu0 11
  %936 = vperm.xlu0 %935, %v690
  %v937 = vpop.permute.xlu0 %936
  %939 = vset.pattern.permute.xlu0 11
  %940 = vperm.xlu0 %939, %v691
  %v941 = vpop.permute.xlu0 %940
  %943 = vset.pattern.permute.xlu0 11
  %944 = vperm.xlu0 %943, %v692
  %v945 = vpop.permute.xlu0 %944
  %947 = vset.pattern.permute.xlu0 11
  %948 = vperm.xlu0 %947, %v693
  %v949 = vpop.permute.xlu0 %948
  %951 = vset.pattern.permute.xlu0 11
  %952 = vperm.xlu0 %951, %v694
  %v953 = vpop.permute.xlu0 %952
  %955 = vset.pattern.permute.xlu0 11
  %956 = vperm.xlu0 %955, %v695
  %v957 = vpop.permute.xlu0 %956
  %v959 = vmul.f32 %v929, %v475
  %v960 = vmul.f32 %v933, %v475
  %v961 = vmul.f32 %v937, %v475
  %v962 = vmul.f32 %v941, %v475
  %v963 = vmul.f32 %v945, %v475
  %v964 = vmul.f32 %v949, %v475
  %v965 = vmul.f32 %v953, %v475
  %v966 = vmul.f32 %v957, %v475
  %v967 = vadd.f32 %v919, %v959
  %v968 = vadd.f32 %v920, %v960
  %v969 = vadd.f32 %v921, %v961
  %v970 = vadd.f32 %v922, %v962
  %v971 = vadd.f32 %v923, %v963
  %v972 = vadd.f32 %v924, %v964
  %v973 = vadd.f32 %v925, %v965
  %v974 = vadd.f32 %v926, %v966
  %v975 = vmax.f32 %v967, 0.0
  %v976 = vmax.f32 %v968, 0.0
  %v977 = vmax.f32 %v969, 0.0
  %v978 = vmax.f32 %v970, 0.0
  %v979 = vmax.f32 %v971, 0.0
  %v980 = vmax.f32 %v972, 0.0
  %v981 = vmax.f32 %v973, 0.0
  %v982 = vmax.f32 %v974, 0.0
  %991 = vrot.lane.b32.xlu0 %v967, 76
  %v992 = vpop.permute.xlu0 %991
  %993 = vrot.lane.b32.xlu0 %v968, 76
  %v994 = vpop.permute.xlu0 %993
  %995 = vrot.lane.b32.xlu0 %v969, 76
  %v996 = vpop.permute.xlu0 %995
  %997 = vrot.lane.b32.xlu0 %v970, 76
  %v998 = vpop.permute.xlu0 %997
  %999 = vrot.lane.b32.xlu0 %v971, 76
  %v1000 = vpop.permute.xlu0 %999
  %1001 = vrot.lane.b32.xlu0 %v972, 76
  %v1002 = vpop.permute.xlu0 %1001
  %1003 = vrot.lane.b32.xlu0 %v973, 76
  %v1004 = vpop.permute.xlu0 %1003
  %1005 = vrot.lane.b32.xlu0 %v974, 76
  %v1006 = vpop.permute.xlu0 %1005
  %vm1015 = vcmask 736960
  %1016 = vst.msk [vmem:[%s3] sm:$0xff] %vm1015, %v992
  %1017 = vst.msk [vmem:[%s3 + $0x8] sm:$0xff] %vm1015, %v994
  %1018 = vst.msk [vmem:[%s3 + $0x10] sm:$0xff] %vm1015, %v996
  %1019 = vst.msk [vmem:[%s3 + $0x18] sm:$0xff] %vm1015, %v998
  %1020 = vst.msk [vmem:[%s3 + $0x20] sm:$0xff] %vm1015, %v1000
  %1021 = vst.msk [vmem:[%s3 + $0x28] sm:$0xff] %vm1015, %v1002
  %1022 = vst.msk [vmem:[%s3 + $0x30] sm:$0xff] %vm1015, %v1004
  %1023 = vst.msk [vmem:[%s3 + $0x38] sm:$0xff] %vm1015, %v1006
  %1032 = vrot.lane.b32.xlu0 %v975, 78
  %v1033 = vpop.permute.xlu0 %1032
  %1034 = vrot.lane.b32.xlu0 %v976, 78
  %v1035 = vpop.permute.xlu0 %1034
  %1036 = vrot.lane.b32.xlu0 %v977, 78
  %v1037 = vpop.permute.xlu0 %1036
  %1038 = vrot.lane.b32.xlu0 %v978, 78
  %v1039 = vpop.permute.xlu0 %1038
  %1040 = vrot.lane.b32.xlu0 %v979, 78
  %v1041 = vpop.permute.xlu0 %1040
  %1042 = vrot.lane.b32.xlu0 %v980, 78
  %v1043 = vpop.permute.xlu0 %1042
  %1044 = vrot.lane.b32.xlu0 %v981, 78
  %v1045 = vpop.permute.xlu0 %1044
  %1046 = vrot.lane.b32.xlu0 %v982, 78
  %v1047 = vpop.permute.xlu0 %1046
  %vm1056 = vcmask 753360
  %1057 = vst.msk [vmem:[%s3] sm:$0xff] %vm1056, %v1033
  %1058 = vst.msk [vmem:[%s3 + $0x8] sm:$0xff] %vm1056, %v1035
  %1059 = vst.msk [vmem:[%s3 + $0x10] sm:$0xff] %vm1056, %v1037
  %1060 = vst.msk [vmem:[%s3 + $0x18] sm:$0xff] %vm1056, %v1039
  %1061 = vst.msk [vmem:[%s3 + $0x20] sm:$0xff] %vm1056, %v1041
  %1062 = vst.msk [vmem:[%s3 + $0x28] sm:$0xff] %vm1056, %v1043
  %1063 = vst.msk [vmem:[%s3 + $0x30] sm:$0xff] %vm1056, %v1045
  %1064 = vst.msk [vmem:[%s3 + $0x38] sm:$0xff] %vm1056, %v1047
  %1065 = vset.pattern.permute.xlu0 12
  %1066 = vperm.xlu0 %1065, %v975
  %v1067 = vpop.permute.xlu0 %1066
  %1069 = vset.pattern.permute.xlu0 12
  %1070 = vperm.xlu0 %1069, %v976
  %v1071 = vpop.permute.xlu0 %1070
  %1073 = vset.pattern.permute.xlu0 12
  %1074 = vperm.xlu0 %1073, %v977
  %v1075 = vpop.permute.xlu0 %1074
  %1077 = vset.pattern.permute.xlu0 12
  %1078 = vperm.xlu0 %1077, %v978
  %v1079 = vpop.permute.xlu0 %1078
  %1081 = vset.pattern.permute.xlu0 12
  %1082 = vperm.xlu0 %1081, %v979
  %v1083 = vpop.permute.xlu0 %1082
  %1085 = vset.pattern.permute.xlu0 12
  %1086 = vperm.xlu0 %1085, %v980
  %v1087 = vpop.permute.xlu0 %1086
  %1089 = vset.pattern.permute.xlu0 12
  %1090 = vperm.xlu0 %1089, %v981
  %v1091 = vpop.permute.xlu0 %1090
  %1093 = vset.pattern.permute.xlu0 12
  %1094 = vperm.xlu0 %1093, %v982
  %v1095 = vpop.permute.xlu0 %1094
  %v1097 = vmul.f32 %v1067, %v323
  %v1098 = vmul.f32 %v1071, %v323
  %v1099 = vmul.f32 %v1075, %v323
  %v1100 = vmul.f32 %v1079, %v323
  %v1101 = vmul.f32 %v1083, %v323
  %v1102 = vmul.f32 %v1087, %v323
  %v1103 = vmul.f32 %v1091, %v323
  %v1104 = vmul.f32 %v1095, %v323
  %v1105 = vperm.slane %v26, 4
  %1107 = vrot.lane.b32.xlu0 %v1105, 14
  %v1108 = vpop.permute.xlu0 %1107
  %v1110 = vadd.f32 %v1097, %v1108
  %v1111 = vadd.f32 %v1098, %v1108
  %v1112 = vadd.f32 %v1099, %v1108
  %v1113 = vadd.f32 %v1100, %v1108
  %v1114 = vadd.f32 %v1101, %v1108
  %v1115 = vadd.f32 %v1102, %v1108
  %v1116 = vadd.f32 %v1103, %v1108
  %v1117 = vadd.f32 %v1104, %v1108
  %1118 = vset.pattern.permute.xlu0 13
  %1119 = vperm.xlu0 %1118, %v975
  %v1120 = vpop.permute.xlu0 %1119
  %1122 = vset.pattern.permute.xlu0 13
  %1123 = vperm.xlu0 %1122, %v976
  %v1124 = vpop.permute.xlu0 %1123
  %1126 = vset.pattern.permute.xlu0 13
  %1127 = vperm.xlu0 %1126, %v977
  %v1128 = vpop.permute.xlu0 %1127
  %1130 = vset.pattern.permute.xlu0 13
  %1131 = vperm.xlu0 %1130, %v978
  %v1132 = vpop.permute.xlu0 %1131
  %1134 = vset.pattern.permute.xlu0 13
  %1135 = vperm.xlu0 %1134, %v979
  %v1136 = vpop.permute.xlu0 %1135
  %1138 = vset.pattern.permute.xlu0 13
  %1139 = vperm.xlu0 %1138, %v980
  %v1140 = vpop.permute.xlu0 %1139
  %1142 = vset.pattern.permute.xlu0 13
  %1143 = vperm.xlu0 %1142, %v981
  %v1144 = vpop.permute.xlu0 %1143
  %1146 = vset.pattern.permute.xlu0 13
  %1147 = vperm.xlu0 %1146, %v982
  %v1148 = vpop.permute.xlu0 %1147
  %v1150 = vmul.f32 %v1120, %v377
  %v1151 = vmul.f32 %v1124, %v377
  %v1152 = vmul.f32 %v1128, %v377
  %v1153 = vmul.f32 %v1132, %v377
  %v1154 = vmul.f32 %v1136, %v377
  %v1155 = vmul.f32 %v1140, %v377
  %v1156 = vmul.f32 %v1144, %v377
  %v1157 = vmul.f32 %v1148, %v377
  %v1158 = vadd.f32 %v1110, %v1150
  %v1159 = vadd.f32 %v1111, %v1151
  %v1160 = vadd.f32 %v1112, %v1152
  %v1161 = vadd.f32 %v1113, %v1153
  %v1162 = vadd.f32 %v1114, %v1154
  %v1163 = vadd.f32 %v1115, %v1155
  %v1164 = vadd.f32 %v1116, %v1156
  %v1165 = vadd.f32 %v1117, %v1157
  %1174 = vrot.lane.b32.xlu0 %v1158, 78
  %v1175 = vpop.permute.xlu0 %1174
  %1176 = vrot.lane.b32.xlu0 %v1159, 78
  %v1177 = vpop.permute.xlu0 %1176
  %1178 = vrot.lane.b32.xlu0 %v1160, 78
  %v1179 = vpop.permute.xlu0 %1178
  %1180 = vrot.lane.b32.xlu0 %v1161, 78
  %v1181 = vpop.permute.xlu0 %1180
  %1182 = vrot.lane.b32.xlu0 %v1162, 78
  %v1183 = vpop.permute.xlu0 %1182
  %1184 = vrot.lane.b32.xlu0 %v1163, 78
  %v1185 = vpop.permute.xlu0 %1184
  %1186 = vrot.lane.b32.xlu0 %v1164, 78
  %v1187 = vpop.permute.xlu0 %1186
  %1188 = vrot.lane.b32.xlu0 %v1165, 78
  %v1189 = vpop.permute.xlu0 %1188
  %vm1198 = vcmask 769760
  %1199 = vst.msk [vmem:[%s3] sm:$0xff] %vm1198, %v1175
  %1200 = vst.msk [vmem:[%s3 + $0x8] sm:$0xff] %vm1198, %v1177
  %1201 = vst.msk [vmem:[%s3 + $0x10] sm:$0xff] %vm1198, %v1179
  %1202 = vst.msk [vmem:[%s3 + $0x18] sm:$0xff] %vm1198, %v1181
  %1203 = vst.msk [vmem:[%s3 + $0x20] sm:$0xff] %vm1198, %v1183
  %1204 = vst.msk [vmem:[%s3 + $0x28] sm:$0xff] %vm1198, %v1185
  %1205 = vst.msk [vmem:[%s3 + $0x30] sm:$0xff] %vm1198, %v1187
  %1206 = vst.msk [vmem:[%s3 + $0x38] sm:$0xff] %vm1198, %v1189
  %vm1207 = vcmask 1048304
  %1208 = vst.msk [vmem:[%s3] sm:$0xff] %vm1207, 0.0
  %1209 = vst.msk [vmem:[%s3 + $0x8] sm:$0xff] %vm1207, 0.0
  %1210 = vst.msk [vmem:[%s3 + $0x10] sm:$0xff] %vm1207, 0.0
  %1211 = vst.msk [vmem:[%s3 + $0x18] sm:$0xff] %vm1207, 0.0
  %1212 = vst.msk [vmem:[%s3 + $0x20] sm:$0xff] %vm1207, 0.0
  %1213 = vst.msk [vmem:[%s3 + $0x28] sm:$0xff] %vm1207, 0.0
  %1214 = vst.msk [vmem:[%s3 + $0x30] sm:$0xff] %vm1207, 0.0
  %1215 = vst.msk [vmem:[%s3 + $0x38] sm:$0xff] %vm1207, 0.0
  // Predicated region
  $region14: #{optimal_feature_learning_forward.1} parent=0 // pred_check
    _
  $region15: #{optimal_feature_learning_forward.1} parent=0 // pred_check_branch
    %1217 = sbr.rel (0) target = $region17
  $region16: #{optimal_feature_learning_forward.1} parent=0 // pred_region
    _
  $region17: #{optimal_feature_learning_forward.1} parent=0 // pred_fallthru
    _
  // Predicated region
  $region18: #{optimal_feature_learning_forward.1} parent=0 // pred_check
    _
  $region19: #{optimal_feature_learning_forward.1} parent=0 // pred_check_branch
    %1219 = sbr.rel (0) target = $region21
  $region20: #{optimal_feature_learning_forward.1} parent=0 // pred_region
    _
  $region21: #{optimal_feature_learning_forward.1} parent=0 // pred_fallthru
    _

</llo_original>
